<compile_context>
chip_gen: v5e
topology: v5e:2x2
jax: 0.10.0
libtpu: 0.0.40
codegen_flags: <defaults>
</compile_context>

<pallas_src>
import jax
import jax.numpy as jnp
from jax.experimental import pallas as pl
from jax.experimental.pallas import tpu as pltpu


def _flat_copy_kernel(x_ref, o_ref):
    # Lane-dense whole-tile copy: unmasked full-vreg loads/stores.
    o_ref[...] = x_ref[...]


def _pick_tile_b(B: int, flat: int, itemsize: int, budget_bytes: int = 4 << 20) -> int:
    """Pick a batch-tile size.

    Constraints:
      * tile_b must divide B and be a multiple of 8 (sublane tiling), OR be
        exactly B (full-extent block is always legal).
      * keep one block <= ~4 MiB so that (2 in + 2 out) double-buffered blocks
        stay well under the scoped-VMEM limit on every generation
        (16 MiB default on v5e, 32 MiB on v6e/v7x; v7x has 64 MiB physical).
    """
    max_rows = max(8, budget_bytes // max(1, flat * itemsize))
    best = None
    t = 8
    while t <= min(B, max_rows, 4096):
        if B % t == 0:
            best = t
        t += 8
    return best if best is not None else B


def unflatten1d(x: jax.Array, channels: int) -> jax.Array:
    """Pallas equivalent of UnFlatten1d(channels).forward(x)."""
    B, flat = x.shape
    assert flat % channels == 0, "input.size(1) must be divisible by channels"
    feature_size = flat // channels

    itemsize = jnp.dtype(x.dtype).itemsize
    tile_b = _pick_tile_b(B, flat, itemsize)
    grid = (pl.cdiv(B, tile_b),)

    out_flat = pl.pallas_call(
        _flat_copy_kernel,
        out_shape=jax.ShapeDtypeStruct((B, flat), x.dtype),
        grid_spec=pl.GridSpec(
            grid=grid,
            in_specs=[pl.BlockSpec((tile_b, flat), lambda i: (i, 0))],
            out_specs=pl.BlockSpec((tile_b, flat), lambda i: (i, 0)),
        ),
        compiler_params=pltpu.CompilerParams(
            # Shard the batch grid axis across TensorCores (2 TCs on v7x).
            dimension_semantics=("parallel",),
            # Explicit headroom; blocks are sized to fit v5e's 16 MiB default too.
            vmem_limit_bytes=32 << 20,
        ),
        cost_estimate=pl.CostEstimate(
            flops=0,
            transcendentals=0,
            bytes_accessed=2 * B * flat * itemsize,
        ),
    )(x)

    # Contiguous (B, C*F) -> (B, C, F) reshape is metadata-only (free).
    return out_flat.reshape(B, channels, feature_size)


if __name__ == "__main__":
    key = jax.random.PRNGKey(0)

    # Small shape matching the module's forward: batch=2, channels=4, feature=8.
    B, C, F = 2, 4, 8
    x = jax.random.normal(key, (B, C * F), dtype=jnp.float32)
    out = jax.block_until_ready(unflatten1d(x, channels=C))
    assert out.shape == (B, C, F)
    assert jnp.array_equal(out, x.reshape(B, C, F))

    # Slightly larger shape to exercise the batch-tiled grid path.
    B2, C2, F2 = 16, 4, 128
    x2 = jax.random.normal(jax.random.PRNGKey(1), (B2, C2 * F2), dtype=jnp.float32)
    out2 = jax.block_until_ready(unflatten1d(x2, channels=C2))
    assert out2.shape == (B2, C2, F2)
    assert jnp.array_equal(out2, x2.reshape(B2, C2, F2))

    print("KERNEL_OK")
</pallas_src>

<mosaic_0001>
module attributes {stable_mosaic.version = 11 : i64} {
  func.func @_flat_copy_kernel(%arg0: i32, %arg1: memref<2x32xf32, #tpu.memory_space<vmem>>, %arg2: memref<2x32xf32, #tpu.memory_space<vmem>>) attributes {dimension_semantics = [#tpu.dimension_semantics<parallel>], iteration_bounds = array<i64: 1>, scalar_prefetch = 0 : i64, scratch_operands = 0 : i64, tpu.core_type = #tpu.core_type<tc>, window_params = [{transform_indices = @transform_0, window_bounds = array<i64: 2, 32>}, {transform_indices = @transform_1, window_bounds = array<i64: 2, 32>}]} {
    %c0 = arith.constant 0 : index
    %c0_0 = arith.constant 0 : index
    %0 = vector.load %arg1[%c0, %c0_0] : memref<2x32xf32, #tpu.memory_space<vmem>>, vector<2x32xf32>
    %c0_1 = arith.constant 0 : index
    %c0_2 = arith.constant 0 : index
    %1 = vector.load %arg2[%c0_1, %c0_2] : memref<2x32xf32, #tpu.memory_space<vmem>>, vector<2x32xf32>
    tpu.vector_store %arg2[%c0_1, %c0_2], %0 {strides = array<i32>} : memref<2x32xf32, #tpu.memory_space<vmem>>, vector<2x32xf32>,
    return
  }
  func.func @transform_0(%arg0: i32) -> (i32, i32) {
    %c0_i32 = arith.constant 0 : i32
    %c0_i32_0 = arith.constant 0 : i32
    return %arg0, %c0_i32 : i32, i32
  }
  func.func @transform_1(%arg0: i32) -> (i32, i32) {
    %c0_i32 = arith.constant 0 : i32
    %c0_i32_0 = arith.constant 0 : i32
    return %arg0, %c0_i32 : i32, i32
  }
}

</mosaic_0001>

<llo_original>
// kernel: tpu_custom_call.1
$region0: #{tpu_custom_call.1}
  #allocation0 [shape = 'u32[]', space=smem, size = 0x4, offset = 0x4, fixed_abs, tag = 'smem constant byte address 0x4 - core index']
  #allocation1 [shape = 'u32[72,128]{1,0:T(1,128)}', space=vmem, size = 0x9000, scoped, tag = 'internal scratch']
  %s0 = inlined_call_operand.hbm [shape: f32[2,32], index: 0, kind: input, shape index: {}]
  %s1 = inlined_call_operand.hbm [shape: f32[2,32], index: 1, kind: output, shape index: {}]
  %s2 = sld [smem:[#allocation0]]
  $region18: #{tpu_custom_call.1} parent=0
    _
  %s4 = ssub.s32 1, %s2
  %s5 = scalar_select 0, %s4, %s2
  $region1: #{tpu_custom_call.1} parent=0
    #allocation2 [shape = 'u8[1024]{0}', space=vmem, size = 0x400, scoped, tag = 'input window, operand 0, single buffered']
    #allocation3 [shape = 's32[1]{0}', space=sflag, size = 0x4, scoped, tag = 'scoped memory for tpu_custom_call.1']
    #allocation4 [shape = 's32[1]{0}', space=sflag, size = 0x4, scoped, tag = 'scoped memory for tpu_custom_call.1']
    #allocation5 [shape = 'u8[1024]{0}', space=vmem, size = 0x400, scoped, tag = 'output window, operand 0, single buffered']
    %6 = vsyncpa [#allocation3], 0
    %7 = vsyncpa [#allocation4], 0
    // Predicated region
    $region2: #{tpu_custom_call.1} parent=1 // pred_check
      _
    $region3: #{tpu_custom_call.1} parent=1 // pred_check_branch
      %9 = sbr.rel (0) target = $region5
    $region4: #{tpu_custom_call.1} parent=1 // pred_region
      %11 = vsyncadd [#allocation3], 0
      %s13 = sshll.u32 %s0, 4
      %s14 = int_to_ptr.hbm [resolvable:$true] %s13
      %s15 = sshll.u32 [#allocation2], 4
      %s16 = int_to_ptr.vmem [resolvable:$true] %s15
      %18 = dma.hbm_to_vmem [thread:$0]  %s14, 32, %s16, [#allocation3]
    $region5: #{tpu_custom_call.1} parent=1 // pred_fallthru
      _
    // Predicated region
    $region6: #{tpu_custom_call.1} parent=1 // pred_check
      _
    $region7: #{tpu_custom_call.1} parent=1 // pred_check_branch
      %20 = sbr.rel (0) target = $region9
    $region8: #{tpu_custom_call.1} parent=1 // pred_region
      %22 = dma.done [#allocation3], 32
    $region9: #{tpu_custom_call.1} parent=1 // pred_fallthru
      _
    %v23 = vld [vmem:[#allocation2] sm:$0x3]
    %vm24 = vcmask 254976
    %25 = vst.msk [vmem:[#allocation5] sm:$0x3] %vm24, %v23
    // Predicated region
    $region10: #{tpu_custom_call.1} parent=1 // pred_check
      _
    $region11: #{tpu_custom_call.1} parent=1 // pred_check_branch
      %27 = sbr.rel (0) target = $region13
    $region12: #{tpu_custom_call.1} parent=1 // pred_region
      %29 = vsyncadd [#allocation4], 0
      %s31 = sshll.u32 [#allocation5], 4
      %s32 = int_to_ptr.vmem [resolvable:$true] %s31
      %s33 = sshll.u32 %s1, 4
      %s34 = int_to_ptr.hbm [resolvable:$true] %s33
      %36 = dma.vmem_to_hbm [thread:$0]  %s32, 32, %s34, [#allocation4]
    $region13: #{tpu_custom_call.1} parent=1 // pred_fallthru
      _
    // Predicated region
    $region14: #{tpu_custom_call.1} parent=1 // pred_check
      _
    $region15: #{tpu_custom_call.1} parent=1 // pred_check_branch
      %38 = sbr.rel (0) target = $region17
    $region16: #{tpu_custom_call.1} parent=1 // pred_region
      %40 = dma.done [#allocation4], 32
    $region17: #{tpu_custom_call.1} parent=1 // pred_fallthru
      _
    %41 = vsyncpa [#allocation3], 1
    %42 = vsyncpa [#allocation4], 1

</llo_original>
